<compile_context>
chip_gen: v5e
topology: v5e:2x2
jax: 0.10.0
libtpu: 0.0.40
codegen_flags: <defaults>
</compile_context>

<pallas_src>
import functools

import jax
import jax.numpy as jnp
from jax import lax
from jax.experimental import pallas as pl
from jax.experimental.pallas import tpu as pltpu


_MIB = 1024 * 1024
_VMEM_BLOCK_BUDGET = 24 * _MIB      # target for the buffered q-streamed blocks
_VMEM_LIMIT_BYTES = 48 * _MIB       # scoped VMEM request: > v5e's 16 MiB default,
                                    # comfortably < v7x's 64 MiB physical
_KV_RESIDENT_MAX_BYTES = 4 * _MIB   # keep k/v resident for the whole grid if this small

# Accurate f32 matmuls on the MXU (and in the reference) — the kernel is
# memory-bound, so the extra MXU passes are hidden under DMA.
_MXU_PRECISION = lax.Precision.HIGHEST


def _attention_kernel(t_ref, k_ref, v_ref, wc_ref, attn_ref, *, kv_resident):
    # t_ref:    (idf, tq)            query block, channels-major (no wrapper transpose)
    # k_ref:    (B, idf, sourceL) if kv_resident else (idf, sourceL)
    # v_ref:    (B, vdf, sourceL) if kv_resident else (vdf, sourceL)
    # wc_ref:   (vdf, tq)            weightedContext block
    # attn_ref: (sourceL, tq)        attn^T block (lane-dense store)
    if kv_resident:
        b = pl.program_id(0)
        k = k_ref[b]                 # (idf, sourceL)
        v = v_ref[b]                 # (vdf, sourceL)
    else:
        k = k_ref[...]
        v = v_ref[...]
    t = t_ref[...]                   # (idf, tq)

    # attn^T scores directly: (sourceL, tq).  Contract idf (dim 0 of both
    # operands); the big query tile is consumed natively and queryL stays on
    # the 128-lane axis everywhere.
    s_t = lax.dot_general(
        k, t,
        dimension_numbers=(((0,), (0,)), ((), ())),
        preferred_element_type=jnp.float32,
        precision=_MXU_PRECISION,
    )

    # Softmax over sourceL (axis 0) — matches nn.Softmax on the
    # (B*queryL, sourceL) 2-D view of the PyTorch module.  Keeping the
    # transposed orientation makes both output stores lane-dense; the
    # sublane reductions over sourceL are a handful of XLU ops hidden
    # under DMA.
    m = jnp.max(s_t, axis=0, keepdims=True)         # (1, tq)
    e = jnp.exp(s_t - m)                            # (sourceL, tq)
    denom = jnp.sum(e, axis=0, keepdims=True)       # (1, tq)
    a_t = e / denom                                 # exact divide (free: mem-bound kernel)

    attn_ref[...] = a_t.astype(attn_ref.dtype)

    # weightedContext block: (vdf, tq) = content_value @ attn^T (no transposes).
    wc = jnp.dot(v, a_t.astype(v.dtype),
                 preferred_element_type=jnp.float32,
                 precision=_MXU_PRECISION)
    wc_ref[...] = wc.astype(wc_ref.dtype)


def _choose_tq(queryL, *, bytes_per_q_elem, batch, budget=_VMEM_BLOCK_BUDGET):
    """Pick the q-tile size (lane axis).

    Largest multiple of 128 that divides queryL and whose buffered q-streamed
    blocks (target + weightedContext + attn^T) fit in `budget`.  When batch==1
    keep at least 2 (preferably an even number of) grid steps along q so both
    of v7x's TensorCores get work.  If queryL is not a multiple of 128, fall
    back to a single full-extent block (exempt from the (8,128) rule).
    """
    if queryL % 128 != 0:
        # TODO(synk): guard scoped VMEM for very large non-128-multiple images.
        return queryL
    cap = max(128, (budget // max(bytes_per_q_elem, 1)) // 128 * 128)
    cands = [t for t in range(128, queryL + 1, 128) if queryL % t == 0]
    cands.sort(reverse=True)                               # largest first
    within = [t for t in cands if t <= cap] or [128]
    if batch == 1:
        even = [t for t in within if (queryL // t) >= 2 and (queryL // t) % 2 == 0]
        if even:
            return even[0]
        ge2 = [t for t in within if (queryL // t) >= 2]
        if ge2:
            return ge2[0]
    return within[0]


def _make_spec(block_shape, index_map, pipeline_mode=None):
    if pipeline_mode is None:
        return pl.BlockSpec(block_shape, index_map)
    return pl.BlockSpec(block_shape, index_map, pipeline_mode=pipeline_mode)


def global_attention_general(inp, context_key, content_value, *,
                             attn_dtype=None,
                             vmem_block_budget=_VMEM_BLOCK_BUDGET):
    """
    inp:           (B, idf, ih, iw)   (queryL = ih*iw)
    context_key:   (B, idf, sourceL)  (cdf == idf required by the bmm)
    content_value: (B, vdf, sourceL)
    attn_dtype:    optional dtype for the attn output (e.g. jnp.bfloat16 when
                   attn is only used for visualization); default = inp.dtype.
    returns: (weightedContext (B, vdf, ih, iw), attn (B, sourceL, ih, iw))
    """
    B, idf, ih, iw = inp.shape
    queryL = ih * iw
    _, cdf, sourceL = context_key.shape
    assert cdf == idf, "context_key feature dim must match input channels"
    vdf = content_value.shape[1]
    out_dtype = inp.dtype
    attn_dtype = out_dtype if attn_dtype is None else jnp.dtype(attn_dtype)

    # Free reshape (no transpose, no extra HBM pass): per-batch (idf, queryL).
    target = inp.reshape(B, idf, queryL)

    in_itemsize = jnp.dtype(inp.dtype).itemsize
    attn_itemsize = jnp.dtype(attn_dtype).itemsize

    # Per-q-element VMEM footprint of the streamed blocks, budgeted for up to
    # 3 buffers (double-buffer default, Buffered(3) opt-in below).
    bytes_per_q_elem = 3 * (idf * in_itemsize + vdf * in_itemsize
                            + sourceL * attn_itemsize)
    tq = _choose_tq(queryL, bytes_per_q_elem=bytes_per_q_elem, batch=B,
                    budget=vmem_block_budget)
    n_q = queryL // tq

    # context_key / content_value: whole-grid resident when small, else
    # per-batch resident blocks.
    kv_bytes = B * (idf + vdf) * sourceL * in_itemsize
    kv_resident = kv_bytes <= _KV_RESIDENT_MAX_BYTES
    if kv_resident:
        k_spec = pl.BlockSpec((B, idf, sourceL), lambda b, q: (0, 0, 0))
        v_spec = pl.BlockSpec((B, vdf, sourceL), lambda b, q: (0, 0, 0))
    else:
        k_spec = pl.BlockSpec((None, idf, sourceL), lambda b, q: (b, 0, 0))
        v_spec = pl.BlockSpec((None, vdf, sourceL), lambda b, q: (b, 0, 0))

    # Deeper pipelining only pays off when the grid is long and tiles moderate
    # (per-step compute is tiny, so DMA must be kept busy across boundaries).
    pipeline = pl.Buffered(3) if (n_q >= 8 and tq <= 1024) else None

    t_spec = _make_spec((None, idf, tq), lambda b, q: (b, 0, q), pipeline)
    wc_spec = _make_spec((None, vdf, tq), lambda b, q: (b, 0, q), pipeline)
    attn_spec = _make_spec((None, sourceL, tq), lambda b, q: (b, 0, q), pipeline)

    out_shapes = (
        jax.ShapeDtypeStruct((B, vdf, queryL), out_dtype),      # weightedContext
        jax.ShapeDtypeStruct((B, sourceL, queryL), attn_dtype), # attn^T
    )

    flops = 2 * B * queryL * sourceL * (idf + vdf)
    bytes_accessed = (
        in_itemsize * B * idf * queryL            # target
        + in_itemsize * B * idf * sourceL         # context_key
        + in_itemsize * B * vdf * sourceL         # content_value
        + in_itemsize * B * vdf * queryL          # weightedContext
        + attn_itemsize * B * sourceL * queryL    # attn^T
    )
    cost = pl.CostEstimate(
        flops=int(flops),
        transcendentals=int(B * queryL * sourceL),   # exp
        bytes_accessed=int(bytes_accessed),
    )

    grid_spec = pltpu.PrefetchScalarGridSpec(
        num_scalar_prefetch=0,
        grid=(B, n_q),
        in_specs=[t_spec, k_spec, v_spec],
        out_specs=[wc_spec, attn_spec],
    )

    kernel = functools.partial(_attention_kernel, kv_resident=kv_resident)

    wc, attn_t = pl.pallas_call(
        kernel,
        out_shape=out_shapes,
        grid_spec=grid_spec,
        compiler_params=pltpu.CompilerParams(
            dimension_semantics=("parallel", "parallel"),
            vmem_limit_bytes=_VMEM_LIMIT_BYTES,
        ),
        cost_estimate=cost,
    )(target, context_key, content_value)

    weighted_context = wc.reshape(B, vdf, ih, iw)
    attn = attn_t.reshape(B, sourceL, ih, iw)
    return weighted_context, attn


def _reference(inp, context_key, content_value):
    B, idf, ih, iw = inp.shape
    queryL = ih * iw
    sourceL = context_key.shape[2]
    vdf = content_value.shape[1]
    hp = lax.Precision.HIGHEST
    target = inp.reshape(B, idf, queryL)
    targetT = jnp.transpose(target, (0, 2, 1))
    attn = jnp.einsum("bqd,bds->bqs", targetT, context_key, precision=hp)
    attn = jax.nn.softmax(attn.reshape(B * queryL, sourceL), axis=-1)
    attn = attn.reshape(B, queryL, sourceL)
    attn_t = jnp.transpose(attn, (0, 2, 1))
    wc = jnp.einsum("bvs,bsq->bvq", content_value, attn_t, precision=hp)
    return wc.reshape(B, vdf, ih, iw), attn_t.reshape(B, sourceL, ih, iw)


if __name__ == "__main__":
    B, idf, ih, iw = 2, 32, 16, 16     # queryL = 256
    sourceL = 8                        # cdf == idf (required by the bmm)
    vdf = 32                           # content_value feature dim

    key = jax.random.PRNGKey(0)
    k1, k2, k3 = jax.random.split(key, 3)
    inp = jax.random.normal(k1, (B, idf, ih, iw), dtype=jnp.float32)
    context_key = jax.random.normal(k2, (B, idf, sourceL), dtype=jnp.float32)
    content_value = jax.random.normal(k3, (B, vdf, sourceL), dtype=jnp.float32)

    wc, attn = global_attention_general(inp, context_key, content_value)
    jax.block_until_ready((wc, attn))

    wc_ref, attn_ref = _reference(inp, context_key, content_value)
    # Exact softmax division + HIGHEST-precision matmuls on both sides, so the
    # remaining differences are only f32 rounding / backend exp differences.
    assert jnp.allclose(wc, wc_ref, atol=2e-3, rtol=2e-3)
    assert jnp.allclose(attn, attn_ref, atol=2e-3, rtol=2e-3)

    print("KERNEL_OK")
</pallas_src>

<mosaic_0001>
module attributes {stable_mosaic.version = 11 : i64} {
  func.func @_attention_kernel(%arg0: i32, %arg1: i32, %arg2: memref<1x32x256xf32, #tpu.memory_space<vmem>>, %arg3: memref<2x32x8xf32, #tpu.memory_space<vmem>>, %arg4: memref<2x32x8xf32, #tpu.memory_space<vmem>>, %arg5: memref<1x32x256xf32, #tpu.memory_space<vmem>>, %arg6: memref<1x8x256xf32, #tpu.memory_space<vmem>>) attributes {dimension_semantics = [#tpu.dimension_semantics<parallel>, #tpu.dimension_semantics<parallel>], iteration_bounds = array<i64: 2, 1>, scalar_prefetch = 0 : i64, scratch_operands = 0 : i64, tpu.core_type = #tpu.core_type<tc>, window_params = [{transform_indices = @transform_0, window_bounds = array<i64: 1, 32, 256>}, {pipeline_mode = #tpu.pipeline_mode<synchronous>, transform_indices = @transform_1, window_bounds = array<i64: 2, 32, 8>}, {pipeline_mode = #tpu.pipeline_mode<synchronous>, transform_indices = @transform_2, window_bounds = array<i64: 2, 32, 8>}, {transform_indices = @transform_3, window_bounds = array<i64: 1, 32, 256>}, {transform_indices = @transform_4, window_bounds = array<i64: 1, 8, 256>}]} {
    %0 = arith.index_cast %arg0 : i32 to index
    %c0 = arith.constant 0 : index
    %c0_0 = arith.constant 0 : index
    %1 = vector.load %arg3[%0, %c0, %c0_0] : memref<2x32x8xf32, #tpu.memory_space<vmem>>, vector<1x32x8xf32>
    %2 = vector.shape_cast %1 : vector<1x32x8xf32> to vector<32x8xf32>
    %3 = arith.index_cast %arg0 : i32 to index
    %c0_1 = arith.constant 0 : index
    %c0_2 = arith.constant 0 : index
    %4 = vector.load %arg4[%3, %c0_1, %c0_2] : memref<2x32x8xf32, #tpu.memory_space<vmem>>, vector<1x32x8xf32>
    %5 = vector.shape_cast %4 : vector<1x32x8xf32> to vector<32x8xf32>
    %c0_3 = arith.constant 0 : index
    %c0_4 = arith.constant 0 : index
    %c0_5 = arith.constant 0 : index
    %6 = vector.load %arg2[%c0_3, %c0_4, %c0_5] : memref<1x32x256xf32, #tpu.memory_space<vmem>>, vector<1x32x256xf32>
    %7 = vector.shape_cast %6 : vector<1x32x256xf32> to vector<32x256xf32>
    %cst = arith.constant dense<0.000000e+00> : vector<8x256xf32>
    %8 = tpu.matmul %2, %7, %cst {dimension_numbers = #tpu.dot_dimension_numbers<[0], [0], [1], [1], [0, 1, 1, 1], [], []>, precision = #tpu.contract_precision<fp32>} : vector<32x8xf32>, vector<32x256xf32>, vector<8x256xf32> -> vector<8x256xf32>
    %cst_6 = arith.constant dense<0xFF800000> : vector<256xf32>
    %9 = vector.multi_reduction <maximumf>, %8, %cst_6 [0] : vector<8x256xf32> to vector<256xf32>
    %10 = vector.shape_cast %9 : vector<256xf32> to vector<1x256xf32>
    %11 = vector.broadcast %10 : vector<1x256xf32> to vector<8x256xf32>
    %12 = arith.subf %8, %11 : vector<8x256xf32>
    %13 = math.exp %12 : vector<8x256xf32>
    %cst_7 = arith.constant dense<0.000000e+00> : vector<256xf32>
    %14 = vector.multi_reduction <add>, %13, %cst_7 [0] : vector<8x256xf32> to vector<256xf32>
    %15 = vector.shape_cast %14 : vector<256xf32> to vector<1x256xf32>
    %16 = vector.broadcast %15 : vector<1x256xf32> to vector<8x256xf32>
    %17 = arith.divf %13, %16 : vector<8x256xf32>
    %c0_8 = arith.constant 0 : index
    %c0_9 = arith.constant 0 : index
    %c0_10 = arith.constant 0 : index
    %18 = vector.load %arg6[%c0_8, %c0_9, %c0_10] : memref<1x8x256xf32, #tpu.memory_space<vmem>>, vector<1x8x256xf32>
    %19 = vector.shape_cast %18 : vector<1x8x256xf32> to vector<8x256xf32>
    %20 = vector.shape_cast %17 : vector<8x256xf32> to vector<1x8x256xf32>
    tpu.vector_store %arg6[%c0_8, %c0_9, %c0_10], %20 {strides = array<i32>} : memref<1x8x256xf32, #tpu.memory_space<vmem>>, vector<1x8x256xf32>,
    %cst_11 = arith.constant dense<0.000000e+00> : vector<32x256xf32>
    %21 = tpu.matmul %5, %17, %cst_11 {dimension_numbers = #tpu.dot_dimension_numbers<[1], [0], [0], [1], [0, 0, 1, 1], [], []>, precision = #tpu.contract_precision<fp32>} : vector<32x8xf32>, vector<8x256xf32>, vector<32x256xf32> -> vector<32x256xf32>
    %c0_12 = arith.constant 0 : index
    %c0_13 = arith.constant 0 : index
    %c0_14 = arith.constant 0 : index
    %22 = vector.load %arg5[%c0_12, %c0_13, %c0_14] : memref<1x32x256xf32, #tpu.memory_space<vmem>>, vector<1x32x256xf32>
    %23 = vector.shape_cast %22 : vector<1x32x256xf32> to vector<32x256xf32>
    %24 = vector.shape_cast %21 : vector<32x256xf32> to vector<1x32x256xf32>
    tpu.vector_store %arg5[%c0_12, %c0_13, %c0_14], %24 {strides = array<i32>} : memref<1x32x256xf32, #tpu.memory_space<vmem>>, vector<1x32x256xf32>,
    return
  }
  func.func @transform_0(%arg0: i32, %arg1: i32) -> (i32, i32, i32) {
    %c0_i32 = arith.constant 0 : i32
    %c0_i32_0 = arith.constant 0 : i32
    return %arg0, %c0_i32, %arg1 : i32, i32, i32
  }
  func.func @transform_1(%arg0: i32, %arg1: i32) -> (i32, i32, i32) {
    %c0_i32 = arith.constant 0 : i32
    %c0_i32_0 = arith.constant 0 : i32
    %c0_i32_1 = arith.constant 0 : i32
    %c0_i32_2 = arith.constant 0 : i32
    return %c0_i32, %c0_i32_0, %c0_i32_1 : i32, i32, i32
  }
  func.func @transform_2(%arg0: i32, %arg1: i32) -> (i32, i32, i32) {
    %c0_i32 = arith.constant 0 : i32
    %c0_i32_0 = arith.constant 0 : i32
    %c0_i32_1 = arith.constant 0 : i32
    %c0_i32_2 = arith.constant 0 : i32
    return %c0_i32, %c0_i32_0, %c0_i32_1 : i32, i32, i32
  }
  func.func @transform_3(%arg0: i32, %arg1: i32) -> (i32, i32, i32) {
    %c0_i32 = arith.constant 0 : i32
    %c0_i32_0 = arith.constant 0 : i32
    return %arg0, %c0_i32, %arg1 : i32, i32, i32
  }
  func.func @transform_4(%arg0: i32, %arg1: i32) -> (i32, i32, i32) {
    %c0_i32 = arith.constant 0 : i32
    %c0_i32_0 = arith.constant 0 : i32
    return %arg0, %c0_i32, %arg1 : i32, i32, i32
  }
}

</mosaic_0001>

<llo_original>
// kernel: tpu_custom_call.1
$region0: #{tpu_custom_call.1}
  #allocation0 [shape = 'u32[]', space=smem, size = 0x4, offset = 0x4, fixed_abs, tag = 'smem constant byte address 0x4 - core index']
  #allocation1 [shape = 'u32[72,128]{1,0:T(1,128)}', space=vmem, size = 0x9000, scoped, tag = 'internal scratch']
  %s0 = inlined_call_operand.vmem [shape: f32[2,32,256], index: 0, kind: input, shape index: {}]
  %s1 = inlined_call_operand.vmem [shape: f32[2,32,8], index: 1, kind: input, shape index: {}]
  %s2 = inlined_call_operand.vmem [shape: f32[2,32,8], index: 2, kind: input, shape index: {}]
  %s3 = inlined_call_operand.hbm [shape: f32[2,32,256], index: 3, kind: output, shape index: {0}]
  %s4 = inlined_call_operand.hbm [shape: f32[2,8,256], index: 4, kind: output, shape index: {1}]
  %5 = xla_tuple %s3, %s4
  %s6 = sld [smem:[#allocation0]]
  $region53: #{tpu_custom_call.1} parent=0
    _
  %s8 = ssub.s32 1, %s6
  %s9 = scalar_select 0, %s8, %s6
  $region1: #{tpu_custom_call.1} parent=0
    #allocation2 [shape = 'u8[65536]{0}', space=vmem, size = 0x10000, scoped, tag = 'output window, operand 0']
    #allocation3 [shape = 's32[2]{0}', space=sflag, size = 0x8, scoped, tag = 'scoped memory for tpu_custom_call.1']
    #allocation4 [shape = 'u8[16384]{0}', space=vmem, size = 0x4000, scoped, tag = 'output window, operand 1']
    #allocation5 [shape = 's32[2]{0}', space=sflag, size = 0x8, scoped, tag = 'scoped memory for tpu_custom_call.1']
    %10 = vsyncpa [#allocation3], 0
    %s11 = scalar_lea.sflag [#allocation3], 1
    %12 = vsyncpa %s11, 0
    %13 = vsyncpa [#allocation5], 0
    %s14 = scalar_lea.sflag [#allocation5], 1
    %15 = vsyncpa %s14, 0
    loop: start=0, step=1, limit=4
    $region2: #{tpu_custom_call.1} parent=1 // loop_pre_header
      _
    $region3: #{tpu_custom_call.1} parent=1 // loop_header
      %s17 = sphi 0, %s21
      %p18 = scmp.ge.s32.totalorder %s17, 4
      %s24 = sphi 0, %s36
      %s25 = sphi 0, %s32
      %s26 = sphi 0, %s24
      %s27 = sphi 0, %s25
      %s28 = sphi 0, %s26
      %s29 = sphi 0, %s27
      %s41 = sphi 0, %s43
      %s44 = sphi 0, %s41
      %s45 = sphi 0, %s44
      %s61 = sphi 0, %s45
      %s65 = sphi 0, %s65
      %s67 = sphi 0, %s65
      %s68 = sphi 0, %s67
      %s82 = sphi 0, %s68
      %s86 = sphi 0, %s86
      %s88 = sphi 0, %s86
      %s89 = sphi 0, %s88
      %s103 = sphi 0, %s89
      %s111 = sphi 0, %s113
      %s114 = sphi 0, %s111
      %s115 = sphi 0, %s114
      %s131 = sphi 0, %s115
      %s139 = sphi 0, %s141
      %s142 = sphi 0, %s139
      %s143 = sphi 0, %s142
      %s159 = sphi 0, %s143
    $region4: #{tpu_custom_call.1} parent=1 // loop_header_branch
      %20 = sbr.rel (%p18) target = $region8
    $region5: #{tpu_custom_call.1} parent=1 // loop_body
      %s22 = ssub.s32 %s17, 1
      %s23 = ssub.s32 %s17, 2
      %s30 = sadd.s32 1, %s25
      %p31 = scmp.ge.s32.totalorder %s30, 1
      %s32 = scalar_select %p31, 0, %s30
      %s33 = sadd.s32 1, %s24
      %s34 = scalar_select %p31, %s33, %s24
      %p35 = scmp.ge.s32.totalorder %s34, 2
      %s36 = scalar_select %p35, 0, %s34
      %s37 = ssub.s32 %s24, %s36
      %s38 = ssub.s32 %s25, %s32
      %s39 = sor.u32 %s37, %s38
      %p40 = scmp.eq.s32.totalorder %s39, 0
      %s42 = sadd.s32 %s41, 1
      %s43 = scalar_select %p40, %s41, %s42
      %p46 = pneg %p40
      %p47 = scmp.eq.s32.totalorder %s17, 1
      %p48 = por %p46, %p47
      %p49 = scmp.ne.s32.totalorder %s41, %s44
      %p50 = scmp.eq.s32.totalorder %s17, 0
      %p51 = por %p49, %p50
      %p52 = scmp.ne.s32.totalorder %s41, %s44
      %p53 = scmp.eq.s32.totalorder %s22, 1
      %p54 = por %p52, %p53
      %p55 = scmp.ne.s32.totalorder %s44, %s45
      %p56 = scmp.eq.s32.totalorder %s22, 0
      %p57 = por %p55, %p56
      %p58 = scmp.ne.s32.totalorder %s44, %s45
      %p59 = scmp.eq.s32.totalorder %s23, 1
      %p60 = por %p58, %p59
      %p62 = scmp.ne.s32.totalorder %s45, %s61
      %p63 = scmp.eq.s32.totalorder %s23, 0
      %p64 = por %p62, %p63
      %s66 = sadd.s32 %s65, 1
      %p69 = scmp.eq.s32.totalorder %s17, 1
      %p70 = scmp.ne.s32.totalorder %s65, %s67
      %p71 = scmp.eq.s32.totalorder %s17, 0
      %p72 = por %p70, %p71
      %p73 = scmp.ne.s32.totalorder %s65, %s67
      %p74 = scmp.eq.s32.totalorder %s22, 1
      %p75 = por %p73, %p74
      %p76 = scmp.ne.s32.totalorder %s67, %s68
      %p77 = scmp.eq.s32.totalorder %s22, 0
      %p78 = por %p76, %p77
      %p79 = scmp.ne.s32.totalorder %s67, %s68
      %p80 = scmp.eq.s32.totalorder %s23, 1
      %p81 = por %p79, %p80
      %p83 = scmp.ne.s32.totalorder %s68, %s82
      %p84 = scmp.eq.s32.totalorder %s23, 0
      %p85 = por %p83, %p84
      %s87 = sadd.s32 %s86, 1
      %p90 = scmp.eq.s32.totalorder %s17, 1
      %p91 = scmp.ne.s32.totalorder %s86, %s88
      %p92 = scmp.eq.s32.totalorder %s17, 0
      %p93 = por %p91, %p92
      %p94 = scmp.ne.s32.totalorder %s86, %s88
      %p95 = scmp.eq.s32.totalorder %s22, 1
      %p96 = por %p94, %p95
      %p97 = scmp.ne.s32.totalorder %s88, %s89
      %p98 = scmp.eq.s32.totalorder %s22, 0
      %p99 = por %p97, %p98
      %p100 = scmp.ne.s32.totalorder %s88, %s89
      %p101 = scmp.eq.s32.totalorder %s23, 1
      %p102 = por %p100, %p101
      %p104 = scmp.ne.s32.totalorder %s89, %s103
      %p105 = scmp.eq.s32.totalorder %s23, 0
      %p106 = por %p104, %p105
      %s107 = ssub.s32 %s24, %s36
      %s108 = ssub.s32 %s25, %s32
      %s109 = sor.u32 %s107, %s108
      %p110 = scmp.eq.s32.totalorder %s109, 0
      %s112 = sadd.s32 %s111, 1
      %s113 = scalar_select %p110, %s111, %s112
      %p116 = pneg %p110
      %p117 = scmp.eq.s32.totalorder %s17, 1
      %p118 = por %p116, %p117
      %p119 = scmp.ne.s32.totalorder %s111, %s114
      %p120 = scmp.eq.s32.totalorder %s17, 0
      %p121 = por %p119, %p120
      %p122 = scmp.ne.s32.totalorder %s111, %s114
      %p123 = scmp.eq.s32.totalorder %s22, 1
      %p124 = por %p122, %p123
      %p125 = scmp.ne.s32.totalorder %s114, %s115
      %p126 = scmp.eq.s32.totalorder %s22, 0
      %p127 = por %p125, %p126
      %p128 = scmp.ne.s32.totalorder %s114, %s115
      %p129 = scmp.eq.s32.totalorder %s23, 1
      %p130 = por %p128, %p129
      %p132 = scmp.ne.s32.totalorder %s115, %s131
      %p133 = scmp.eq.s32.totalorder %s23, 0
      %p134 = por %p132, %p133
      %s135 = ssub.s32 %s24, %s36
      %s136 = ssub.s32 %s25, %s32
      %s137 = sor.u32 %s135, %s136
      %p138 = scmp.eq.s32.totalorder %s137, 0
      %s140 = sadd.s32 %s139, 1
      %s141 = scalar_select %p138, %s139, %s140
      %p144 = pneg %p138
      %p145 = scmp.eq.s32.totalorder %s17, 1
      %p146 = por %p144, %p145
      %p147 = scmp.ne.s32.totalorder %s139, %s142
      %p148 = scmp.eq.s32.totalorder %s17, 0
      %p149 = por %p147, %p148
      %p150 = scmp.ne.s32.totalorder %s139, %s142
      %p151 = scmp.eq.s32.totalorder %s22, 1
      %p152 = por %p150, %p151
      %p153 = scmp.ne.s32.totalorder %s142, %s143
      %p154 = scmp.eq.s32.totalorder %s22, 0
      %p155 = por %p153, %p154
      %p156 = scmp.ne.s32.totalorder %s142, %s143
      %p157 = scmp.eq.s32.totalorder %s23, 1
      %p158 = por %p156, %p157
      %p160 = scmp.ne.s32.totalorder %s143, %s159
      %p161 = scmp.eq.s32.totalorder %s23, 0
      %p162 = por %p160, %p161
      %p163 = scmp.le.s32.totalorder 1, %s17
      %p164 = scmp.lt.s32.totalorder %s17, 3
      %p165 = pnand %p163, %p164
      %p166 = pneg %p165
      // Predicated region
      $region9: #{tpu_custom_call.1} parent=5 // pred_check
        _
      $region10: #{tpu_custom_call.1} parent=5 // pred_check_branch
        %168 = sbr.rel (%p165) target = $region12
      $region11: #{tpu_custom_call.1} parent=5 // pred_region
        %s169 = ssub.s32 %s17, 1
        // Predicated region
        $region13: #{tpu_custom_call.1} parent=11 // pred_check
          %p170 = pneg %p78
        $region14: #{tpu_custom_call.1} parent=11 // pred_check_branch
          %172 = sbr.rel (%p170) target = $region16
        $region15: #{tpu_custom_call.1} parent=11 // pred_region
          _
        $region16: #{tpu_custom_call.1} parent=11 // pred_fallthru
          _
        // Predicated region
        $region17: #{tpu_custom_call.1} parent=11 // pred_check
          %p173 = pneg %p99
        $region18: #{tpu_custom_call.1} parent=11 // pred_check_branch
          %175 = sbr.rel (%p173) target = $region20
        $region19: #{tpu_custom_call.1} parent=11 // pred_region
          _
        $region20: #{tpu_custom_call.1} parent=11 // pred_fallthru
          _
      $region12: #{tpu_custom_call.1} parent=5 // pred_fallthru
        _
      %p176 = scmp.lt.s32.totalorder %s17, 2
      // Predicated region
      $region21: #{tpu_custom_call.1} parent=5 // pred_check
        %p177 = pneg %p176
      $region22: #{tpu_custom_call.1} parent=5 // pred_check_branch
        %179 = sbr.rel (%p177) target = $region24
      $region23: #{tpu_custom_call.1} parent=5 // pred_region
        // Predicated region
        $region25: #{tpu_custom_call.1} parent=23 // pred_check
          %p180 = pneg %p51
        $region26: #{tpu_custom_call.1} parent=23 // pred_check_branch
          %182 = sbr.rel (%p180) target = $region28
        $region27: #{tpu_custom_call.1} parent=23 // pred_region
          %s183 = smul.u32 2, %s25
          %p184 = scmp.lt.s32.totalorder %s24, 1
          %s185 = scalar_select %p184, %s24, 1
          %p186 = scmp.lt.s32.totalorder %s183, 1
          %s187 = scalar_select %p186, %s183, 1
          %s188 = smul.addr %s185, 8
          %s189 = sadd.s32 %s187, %s188
          %s190 = smul.addr %s189, 8
          %s191 = scalar_lea.vmem %s0, %s190
          %s192 = smul.u32 2, %s25
        $region28: #{tpu_custom_call.1} parent=23 // pred_fallthru
          _
      $region24: #{tpu_custom_call.1} parent=5 // pred_fallthru
        _
      %p193 = scmp.le.s32.totalorder 1, %s17
      %p194 = scmp.lt.s32.totalorder %s17, 3
      %p195 = pnand %p193, %p194
      %p196 = pneg %p195
      // Predicated region
      $region29: #{tpu_custom_call.1} parent=5 // pred_check
        _
      $region30: #{tpu_custom_call.1} parent=5 // pred_check_branch
        %198 = sbr.rel (%p195) target = $region32
      $region31: #{tpu_custom_call.1} parent=5 // pred_region
        %s199 = ssub.s32 %s17, 1
        %s200 = smul.u32 2, %s27
        %p201 = scmp.lt.s32.totalorder %s26, 1
        %s202 = scalar_select %p201, %s26, 1
        %p203 = scmp.lt.s32.totalorder %s200, 1
        %s204 = scalar_select %p203, %s200, 1
        %s205 = smul.addr %s202, 8
        %s206 = sadd.s32 %s204, %s205
        %s207 = smul.addr %s206, 8
        %s208 = scalar_lea.vmem %s0, %s207
        %p209 = pneg %p57
        %p210 = pneg %p54
        %p211 = pneg %p78
        %p212 = pneg %p75
        %p213 = pneg %p99
        %p214 = pneg %p96
        %p215 = pneg %p127
        %p216 = pneg %p124
        %s217 = sand.u32 %s114, 1
        %s218 = scalar_lea.sflag [#allocation3], %s217
        %s219 = sand.u32 %s114, 1
        %s220 = smul.addr %s219, 64
        %s221 = scalar_lea.vmem [#allocation2], %s220
        %p222 = pneg %p155
        %p223 = pneg %p152
        %s224 = sand.u32 %s142, 1
        %s225 = scalar_lea.sflag [#allocation5], %s224
        %s226 = sand.u32 %s142, 1
        %s227 = smul.addr %s226, 16
        %s228 = scalar_lea.vmem [#allocation4], %s227
        %s229 = smul.u32 2, %s27
        %p230 = scmp.lt.s32.totalorder %s26, 1
        %s231 = scalar_select %p230, %s26, 1
        %p232 = scmp.lt.s32.totalorder %s229, 1
        %s233 = scalar_select %p232, %s229, 1
        %s234 = smul.addr %s231, 8
        %s235 = sadd.s32 %s233, %s234
        %s236 = smul.addr %s235, 8
        %s237 = scalar_lea.vmem %s0, %s236
        %s238 = smul.u32 2, %s27
        %s239 = smul.u32 2, %s27
        %s240 = smul.u32 2, %s27
        %s241 = smul.u32 %s26, 32
        %s242 = scalar_lea.vmem %s1, %s241
        %v243 = vld [vmem:[%s242] sm:$0xff]
        %v244 = vld [vmem:[%s242 + $0x8] sm:$0xff]
        %v245 = vld [vmem:[%s242 + $0x10] sm:$0xff]
        %v246 = vld [vmem:[%s242 + $0x18] sm:$0xff]
        %s247 = scalar_lea.vmem %s2, %s241
        %v248 = vld [vmem:[%s247] sm:$0xff]
        %v249 = vld [vmem:[%s247 + $0x8] sm:$0xff]
        %v250 = vld [vmem:[%s247 + $0x10] sm:$0xff]
        %v251 = vld [vmem:[%s247 + $0x18] sm:$0xff]
        %v252 = vld [vmem:[%s237] sm:$0xff]
        %v253 = vld [vmem:[%s237 + $0x8] sm:$0xff]
        %v254 = vld [vmem:[%s237 + $0x10] sm:$0xff]
        %v255 = vld [vmem:[%s237 + $0x18] sm:$0xff]
        %v256 = vld [vmem:[%s237 + $0x20] sm:$0xff]
        %v257 = vld [vmem:[%s237 + $0x28] sm:$0xff]
        %v258 = vld [vmem:[%s237 + $0x30] sm:$0xff]
        %v259 = vld [vmem:[%s237 + $0x38] sm:$0xff]
        %260 = vxpose.xlu0.b32.start [1/16] %v243, 128
        %261 = vxpose.xlu0.b32.cont [2/16] %v244, 128
        %262 = vxpose.xlu0.b32.cont [3/16] %v245, 128
        %263 = vxpose.xlu0.b32.cont [4/16] %v246, 128
        %264 = vxpose.xlu0.b32.cont [5/16] 0.0, 128
        %265 = vxpose.xlu0.b32.cont [6/16] 0.0, 128
        %266 = vxpose.xlu0.b32.cont [7/16] 0.0, 128
        %267 = vxpose.xlu0.b32.cont [8/16] 0.0, 128
        %268 = vxpose.xlu0.b32.cont [9/16] 0.0, 128
        %269 = vxpose.xlu0.b32.cont [10/16] 0.0, 128
        %270 = vxpose.xlu0.b32.cont [11/16] 0.0, 128
        %271 = vxpose.xlu0.b32.cont [12/16] 0.0, 128
        %272 = vxpose.xlu0.b32.cont [13/16] 0.0, 128
        %273 = vxpose.xlu0.b32.cont [14/16] 0.0, 128
        %274 = vxpose.xlu0.b32.cont [15/16] 0.0, 128
        %275 = vxpose.xlu0.b32.end [16/16] 0.0, 128
        %v276 = vpop.trf.xlu0
        %v277 = vpop.trf.xlu0
        %v278 = vpop.trf.xlu0
        %v279 = vpop.trf.xlu0
        %v280 = vpop.trf.xlu0
        %v281 = vpop.trf.xlu0
        %v282 = vpop.trf.xlu0
        %v283 = vpop.trf.xlu0
        %v284 = vpop.trf.xlu0
        %v285 = vpop.trf.xlu0
        %v286 = vpop.trf.xlu0
        %v287 = vpop.trf.xlu0
        %v288 = vpop.trf.xlu0
        %v289 = vpop.trf.xlu0
        %v290 = vpop.trf.xlu0
        %v291 = vpop.trf.xlu0
        %vm292 = vcmask 261120
        %v294 = vsel %vm292, %v276, 0
        %296 = vmatpush.msra.mxu0 0.0
        %297 = vmatpush.msra.mxu0 0.0
        %298 = vmatpush.msra.mxu0 0.0
        %299 = vmatpush.msra.mxu0 0.0
        %300 = vmatpush.msra.mxu0 0.0
        %301 = vmatpush.msra.mxu0 0.0
        %302 = vmatpush.msra.mxu0 0.0
        %303 = vmatpush.msra.mxu0 0.0
        %304 = vmatpush.msra.mxu0 0.0
        %305 = vmatpush.msra.mxu0 0.0
        %306 = vmatpush.msra.mxu0 0.0
        %307 = vmatpush.msra.mxu0 0.0
        %v308 = vand.u32 %v258, 4294901760
        %309 = vmatpush.msra.mxu0 %v308
        %v310 = vand.u32 %v256, 4294901760
        %311 = vmatpush.msra.mxu0 %v310
        %v312 = vand.u32 %v254, 4294901760
        %313 = vmatpush.msra.mxu0 %v312
        %v314 = vand.u32 %v252, 4294901760
        %315 = vmatpush.msra.mxu0 %v314
        %v316 = vand.u32 %v294, 4294901760
        %v317 = vsub.f32 %v294, %v316
        %v318 = vand.u32 %v317, 4294901760
        %v319 = vsub.f32 %v317, %v318
        %v320 = vand.u32 %v319, 4294901760
        %321 = vmatmul.f32.gmra.mxu0 %v320
        %v322 = vpop.f32.mrf.mxu0
        %v323 = vadd.f32 0.0, %v322
        %324 = vdwg.mxu0
        %325 = vmatpush.msra.mxu0 0.0
        %326 = vmatpush.msra.mxu0 0.0
        %327 = vmatpush.msra.mxu0 0.0
        %328 = vmatpush.msra.mxu0 0.0
        %329 = vmatpush.msra.mxu0 0.0
        %330 = vmatpush.msra.mxu0 0.0
        %331 = vmatpush.msra.mxu0 0.0
        %332 = vmatpush.msra.mxu0 0.0
        %333 = vmatpush.msra.mxu0 0.0
        %334 = vmatpush.msra.mxu0 0.0
        %335 = vmatpush.msra.mxu0 0.0
        %336 = vmatpush.msra.mxu0 0.0
        %v337 = vand.u32 %v258, 4294901760
        %v338 = vsub.f32 %v258, %v337
        %v339 = vand.u32 %v338, 4294901760
        %v340 = vsub.f32 %v338, %v339
        %v341 = vand.u32 %v340, 4294901760
        %342 = vmatpush.msra.mxu0 %v341
        %v343 = vand.u32 %v256, 4294901760
        %v344 = vsub.f32 %v256, %v343
        %v345 = vand.u32 %v344, 4294901760
        %v346 = vsub.f32 %v344, %v345
        %v347 = vand.u32 %v346, 4294901760
        %348 = vmatpush.msra.mxu0 %v347
        %v349 = vand.u32 %v254, 4294901760
        %v350 = vsub.f32 %v254, %v349
        %v351 = vand.u32 %v350, 4294901760
        %v352 = vsub.f32 %v350, %v351
        %v353 = vand.u32 %v352, 4294901760
        %354 = vmatpush.msra.mxu0 %v353
        %v355 = vand.u32 %v252, 4294901760
        %v356 = vsub.f32 %v252, %v355
        %v357 = vand.u32 %v356, 4294901760
        %v358 = vsub.f32 %v356, %v357
        %v359 = vand.u32 %v358, 4294901760
        %360 = vmatpush.msra.mxu0 %v359
        %v361 = vand.u32 %v294, 4294901760
        %362 = vmatmul.f32.gmra.mxu0 %v361
        %v363 = vpop.f32.mrf.mxu0
        %v364 = vadd.f32 %v323, %v363
        %365 = vdwg.mxu0
        %366 = vmatpush.msra.mxu0 0.0
        %367 = vmatpush.msra.mxu0 0.0
        %368 = vmatpush.msra.mxu0 0.0
        %369 = vmatpush.msra.mxu0 0.0
        %370 = vmatpush.msra.mxu0 0.0
        %371 = vmatpush.msra.mxu0 0.0
        %372 = vmatpush.msra.mxu0 0.0
        %373 = vmatpush.msra.mxu0 0.0
        %374 = vmatpush.msra.mxu0 0.0
        %375 = vmatpush.msra.mxu0 0.0
        %376 = vmatpush.msra.mxu0 0.0
        %377 = vmatpush.msra.mxu0 0.0
        %v378 = vand.u32 %v258, 4294901760
        %v379 = vsub.f32 %v258, %v378
        %380 = vmatpush.msra.mxu0 %v379
        %v381 = vand.u32 %v256, 4294901760
        %v382 = vsub.f32 %v256, %v381
        %383 = vmatpush.msra.mxu0 %v382
        %v384 = vand.u32 %v254, 4294901760
        %v385 = vsub.f32 %v254, %v384
        %386 = vmatpush.msra.mxu0 %v385
        %v387 = vand.u32 %v252, 4294901760
        %v388 = vsub.f32 %v252, %v387
        %389 = vmatpush.msra.mxu0 %v388
        %v390 = vand.u32 %v294, 4294901760
        %v391 = vsub.f32 %v294, %v390
        %392 = vmatmul.f32.gmra.mxu0 %v391
        %v393 = vpop.f32.mrf.mxu0
        %v394 = vadd.f32 %v364, %v393
        %395 = vdwg.mxu0
        %396 = vmatpush.msra.mxu0 0.0
        %397 = vmatpush.msra.mxu0 0.0
        %398 = vmatpush.msra.mxu0 0.0
        %399 = vmatpush.msra.mxu0 0.0
        %400 = vmatpush.msra.mxu0 0.0
        %401 = vmatpush.msra.mxu0 0.0
        %402 = vmatpush.msra.mxu0 0.0
        %403 = vmatpush.msra.mxu0 0.0
        %404 = vmatpush.msra.mxu0 0.0
        %405 = vmatpush.msra.mxu0 0.0
        %406 = vmatpush.msra.mxu0 0.0
        %407 = vmatpush.msra.mxu0 0.0
        %v408 = vand.u32 %v258, 4294901760
        %409 = vmatpush.msra.mxu0 %v408
        %v410 = vand.u32 %v256, 4294901760
        %411 = vmatpush.msra.mxu0 %v410
        %v412 = vand.u32 %v254, 4294901760
        %413 = vmatpush.msra.mxu0 %v412
        %v414 = vand.u32 %v252, 4294901760
        %415 = vmatpush.msra.mxu0 %v414
        %v416 = vand.u32 %v294, 4294901760
        %v417 = vsub.f32 %v294, %v416
        %v418 = vand.u32 %v417, 4294901760
        %419 = vmatmul.f32.gmra.mxu0 %v418
        %v420 = vpop.f32.mrf.mxu0
        %v421 = vadd.f32 %v394, %v420
        %422 = vdwg.mxu0
        %423 = vmatpush.msra.mxu0 0.0
        %424 = vmatpush.msra.mxu0 0.0
        %425 = vmatpush.msra.mxu0 0.0
        %426 = vmatpush.msra.mxu0 0.0
        %427 = vmatpush.msra.mxu0 0.0
        %428 = vmatpush.msra.mxu0 0.0
        %429 = vmatpush.msra.mxu0 0.0
        %430 = vmatpush.msra.mxu0 0.0
        %431 = vmatpush.msra.mxu0 0.0
        %432 = vmatpush.msra.mxu0 0.0
        %433 = vmatpush.msra.mxu0 0.0
        %434 = vmatpush.msra.mxu0 0.0
        %v435 = vand.u32 %v258, 4294901760
        %v436 = vsub.f32 %v258, %v435
        %v437 = vand.u32 %v436, 4294901760
        %438 = vmatpush.msra.mxu0 %v437
        %v439 = vand.u32 %v256, 4294901760
        %v440 = vsub.f32 %v256, %v439
        %v441 = vand.u32 %v440, 4294901760
        %442 = vmatpush.msra.mxu0 %v441
        %v443 = vand.u32 %v254, 4294901760
        %v444 = vsub.f32 %v254, %v443
        %v445 = vand.u32 %v444, 4294901760
        %446 = vmatpush.msra.mxu0 %v445
        %v447 = vand.u32 %v252, 4294901760
        %v448 = vsub.f32 %v252, %v447
        %v449 = vand.u32 %v448, 4294901760
        %450 = vmatpush.msra.mxu0 %v449
        %v451 = vand.u32 %v294, 4294901760
        %452 = vmatmul.f32.gmra.mxu0 %v451
        %v453 = vpop.f32.mrf.mxu0
        %v454 = vadd.f32 %v421, %v453
        %455 = vdwg.mxu0
        %456 = vmatpush.msra.mxu0 0.0
        %457 = vmatpush.msra.mxu0 0.0
        %458 = vmatpush.msra.mxu0 0.0
        %459 = vmatpush.msra.mxu0 0.0
        %460 = vmatpush.msra.mxu0 0.0
        %461 = vmatpush.msra.mxu0 0.0
        %462 = vmatpush.msra.mxu0 0.0
        %463 = vmatpush.msra.mxu0 0.0
        %464 = vmatpush.msra.mxu0 0.0
        %465 = vmatpush.msra.mxu0 0.0
        %466 = vmatpush.msra.mxu0 0.0
        %467 = vmatpush.msra.mxu0 0.0
        %v468 = vand.u32 %v258, 4294901760
        %469 = vmatpush.msra.mxu0 %v468
        %v470 = vand.u32 %v256, 4294901760
        %471 = vmatpush.msra.mxu0 %v470
        %v472 = vand.u32 %v254, 4294901760
        %473 = vmatpush.msra.mxu0 %v472
        %v474 = vand.u32 %v252, 4294901760
        %475 = vmatpush.msra.mxu0 %v474
        %v476 = vand.u32 %v294, 4294901760
        %477 = vmatmul.f32.gmra.mxu0 %v476
        %v478 = vpop.f32.mrf.mxu0
        %v479 = vadd.f32 %v454, %v478
        %480 = vdwg.mxu0
        %481 = vmatpush.msra.mxu0 0.0
        %482 = vmatpush.msra.mxu0 0.0
        %483 = vmatpush.msra.mxu0 0.0
        %484 = vmatpush.msra.mxu0 0.0
        %485 = vmatpush.msra.mxu0 0.0
        %486 = vmatpush.msra.mxu0 0.0
        %487 = vmatpush.msra.mxu0 0.0
        %488 = vmatpush.msra.mxu0 0.0
        %489 = vmatpush.msra.mxu0 0.0
        %490 = vmatpush.msra.mxu0 0.0
        %491 = vmatpush.msra.mxu0 0.0
        %492 = vmatpush.msra.mxu0 0.0
        %v493 = vand.u32 %v259, 4294901760
        %494 = vmatpush.msra.mxu0 %v493
        %v495 = vand.u32 %v257, 4294901760
        %496 = vmatpush.msra.mxu0 %v495
        %v497 = vand.u32 %v255, 4294901760
        %498 = vmatpush.msra.mxu0 %v497
        %v499 = vand.u32 %v253, 4294901760
        %500 = vmatpush.msra.mxu0 %v499
        %v501 = vand.u32 %v294, 4294901760
        %v502 = vsub.f32 %v294, %v501
        %v503 = vand.u32 %v502, 4294901760
        %v504 = vsub.f32 %v502, %v503
        %v505 = vand.u32 %v504, 4294901760
        %506 = vmatmul.f32.gmra.mxu0 %v505
        %v507 = vpop.f32.mrf.mxu0
        %v508 = vadd.f32 0.0, %v507
        %509 = vdwg.mxu0
        %510 = vmatpush.msra.mxu0 0.0
        %511 = vmatpush.msra.mxu0 0.0
        %512 = vmatpush.msra.mxu0 0.0
        %513 = vmatpush.msra.mxu0 0.0
        %514 = vmatpush.msra.mxu0 0.0
        %515 = vmatpush.msra.mxu0 0.0
        %516 = vmatpush.msra.mxu0 0.0
        %517 = vmatpush.msra.mxu0 0.0
        %518 = vmatpush.msra.mxu0 0.0
        %519 = vmatpush.msra.mxu0 0.0
        %520 = vmatpush.msra.mxu0 0.0
        %521 = vmatpush.msra.mxu0 0.0
        %v522 = vand.u32 %v259, 4294901760
        %v523 = vsub.f32 %v259, %v522
        %v524 = vand.u32 %v523, 4294901760
        %v525 = vsub.f32 %v523, %v524
        %v526 = vand.u32 %v525, 4294901760
        %527 = vmatpush.msra.mxu0 %v526
        %v528 = vand.u32 %v257, 4294901760
        %v529 = vsub.f32 %v257, %v528
        %v530 = vand.u32 %v529, 4294901760
        %v531 = vsub.f32 %v529, %v530
        %v532 = vand.u32 %v531, 4294901760
        %533 = vmatpush.msra.mxu0 %v532
        %v534 = vand.u32 %v255, 4294901760
        %v535 = vsub.f32 %v255, %v534
        %v536 = vand.u32 %v535, 4294901760
        %v537 = vsub.f32 %v535, %v536
        %v538 = vand.u32 %v537, 4294901760
        %539 = vmatpush.msra.mxu0 %v538
        %v540 = vand.u32 %v253, 4294901760
        %v541 = vsub.f32 %v253, %v540
        %v542 = vand.u32 %v541, 4294901760
        %v543 = vsub.f32 %v541, %v542
        %v544 = vand.u32 %v543, 4294901760
        %545 = vmatpush.msra.mxu0 %v544
        %v546 = vand.u32 %v294, 4294901760
        %547 = vmatmul.f32.gmra.mxu0 %v546
        %v548 = vpop.f32.mrf.mxu0
        %v549 = vadd.f32 %v508, %v548
        %550 = vdwg.mxu0
        %551 = vmatpush.msra.mxu0 0.0
        %552 = vmatpush.msra.mxu0 0.0
        %553 = vmatpush.msra.mxu0 0.0
        %554 = vmatpush.msra.mxu0 0.0
        %555 = vmatpush.msra.mxu0 0.0
        %556 = vmatpush.msra.mxu0 0.0
        %557 = vmatpush.msra.mxu0 0.0
        %558 = vmatpush.msra.mxu0 0.0
        %559 = vmatpush.msra.mxu0 0.0
        %560 = vmatpush.msra.mxu0 0.0
        %561 = vmatpush.msra.mxu0 0.0
        %562 = vmatpush.msra.mxu0 0.0
        %v563 = vand.u32 %v259, 4294901760
        %v564 = vsub.f32 %v259, %v563
        %565 = vmatpush.msra.mxu0 %v564
        %v566 = vand.u32 %v257, 4294901760
        %v567 = vsub.f32 %v257, %v566
        %568 = vmatpush.msra.mxu0 %v567
        %v569 = vand.u32 %v255, 4294901760
        %v570 = vsub.f32 %v255, %v569
        %571 = vmatpush.msra.mxu0 %v570
        %v572 = vand.u32 %v253, 4294901760
        %v573 = vsub.f32 %v253, %v572
        %574 = vmatpush.msra.mxu0 %v573
        %v575 = vand.u32 %v294, 4294901760
        %v576 = vsub.f32 %v294, %v575
        %577 = vmatmul.f32.gmra.mxu0 %v576
        %v578 = vpop.f32.mrf.mxu0
        %v579 = vadd.f32 %v549, %v578
        %580 = vdwg.mxu0
        %581 = vmatpush.msra.mxu0 0.0
        %582 = vmatpush.msra.mxu0 0.0
        %583 = vmatpush.msra.mxu0 0.0
        %584 = vmatpush.msra.mxu0 0.0
        %585 = vmatpush.msra.mxu0 0.0
        %586 = vmatpush.msra.mxu0 0.0
        %587 = vmatpush.msra.mxu0 0.0
        %588 = vmatpush.msra.mxu0 0.0
        %589 = vmatpush.msra.mxu0 0.0
        %590 = vmatpush.msra.mxu0 0.0
        %591 = vmatpush.msra.mxu0 0.0
        %592 = vmatpush.msra.mxu0 0.0
        %v593 = vand.u32 %v259, 4294901760
        %594 = vmatpush.msra.mxu0 %v593
        %v595 = vand.u32 %v257, 4294901760
        %596 = vmatpush.msra.mxu0 %v595
        %v597 = vand.u32 %v255, 4294901760
        %598 = vmatpush.msra.mxu0 %v597
        %v599 = vand.u32 %v253, 4294901760
        %600 = vmatpush.msra.mxu0 %v599
        %v601 = vand.u32 %v294, 4294901760
        %v602 = vsub.f32 %v294, %v601
        %v603 = vand.u32 %v602, 4294901760
        %604 = vmatmul.f32.gmra.mxu0 %v603
        %v605 = vpop.f32.mrf.mxu0
        %v606 = vadd.f32 %v579, %v605
        %607 = vdwg.mxu0
        %608 = vmatpush.msra.mxu0 0.0
        %609 = vmatpush.msra.mxu0 0.0
        %610 = vmatpush.msra.mxu0 0.0
        %611 = vmatpush.msra.mxu0 0.0
        %612 = vmatpush.msra.mxu0 0.0
        %613 = vmatpush.msra.mxu0 0.0
        %614 = vmatpush.msra.mxu0 0.0
        %615 = vmatpush.msra.mxu0 0.0
        %616 = vmatpush.msra.mxu0 0.0
        %617 = vmatpush.msra.mxu0 0.0
        %618 = vmatpush.msra.mxu0 0.0
        %619 = vmatpush.msra.mxu0 0.0
        %v620 = vand.u32 %v259, 4294901760
        %v621 = vsub.f32 %v259, %v620
        %v622 = vand.u32 %v621, 4294901760
        %623 = vmatpush.msra.mxu0 %v622
        %v624 = vand.u32 %v257, 4294901760
        %v625 = vsub.f32 %v257, %v624
        %v626 = vand.u32 %v625, 4294901760
        %627 = vmatpush.msra.mxu0 %v626
        %v628 = vand.u32 %v255, 4294901760
        %v629 = vsub.f32 %v255, %v628
        %v630 = vand.u32 %v629, 4294901760
        %631 = vmatpush.msra.mxu0 %v630
        %v632 = vand.u32 %v253, 4294901760
        %v633 = vsub.f32 %v253, %v632
        %v634 = vand.u32 %v633, 4294901760
        %635 = vmatpush.msra.mxu0 %v634
        %v636 = vand.u32 %v294, 4294901760
        %637 = vmatmul.f32.gmra.mxu0 %v636
        %v638 = vpop.f32.mrf.mxu0
        %v639 = vadd.f32 %v606, %v638
        %640 = vdwg.mxu0
        %641 = vmatpush.msra.mxu0 0.0
        %642 = vmatpush.msra.mxu0 0.0
        %643 = vmatpush.msra.mxu0 0.0
        %644 = vmatpush.msra.mxu0 0.0
        %645 = vmatpush.msra.mxu0 0.0
        %646 = vmatpush.msra.mxu0 0.0
        %647 = vmatpush.msra.mxu0 0.0
        %648 = vmatpush.msra.mxu0 0.0
        %649 = vmatpush.msra.mxu0 0.0
        %650 = vmatpush.msra.mxu0 0.0
        %651 = vmatpush.msra.mxu0 0.0
        %652 = vmatpush.msra.mxu0 0.0
        %v653 = vand.u32 %v259, 4294901760
        %654 = vmatpush.msra.mxu0 %v653
        %v655 = vand.u32 %v257, 4294901760
        %656 = vmatpush.msra.mxu0 %v655
        %v657 = vand.u32 %v255, 4294901760
        %658 = vmatpush.msra.mxu0 %v657
        %v659 = vand.u32 %v253, 4294901760
        %660 = vmatpush.msra.mxu0 %v659
        %v661 = vand.u32 %v294, 4294901760
        %662 = vmatmul.f32.gmra.mxu0 %v661
        %v663 = vpop.f32.mrf.mxu0
        %v664 = vadd.f32 %v639, %v663
        %665 = vdwg.mxu0
        %v666 = vrot.slane %v479, 4
        %v667 = vmax.f32 %v479, %v666
        %v668 = vrot.slane %v667, 2
        %v669 = vmax.f32 %v667, %v668
        %v670 = vrot.slane %v669, 1
        %v671 = vmax.f32 %v669, %v670
        %v672 = vrot.slane %v664, 4
        %v673 = vmax.f32 %v664, %v672
        %v674 = vrot.slane %v673, 2
        %v675 = vmax.f32 %v673, %v674
        %v676 = vrot.slane %v675, 1
        %v677 = vmax.f32 %v675, %v676
        %v678 = vsub.f32 %v479, %v671
        %v679 = vsub.f32 %v664, %v677
        %v680 = vmul.f32 %v678, 1.442695
        %v681 = vpow.pop %v680
        %v682 = vmul.f32 %v679, 1.442695
        %v683 = vpow.pop %v682
        %v684 = vrot.slane %v681, 4
        %v685 = vadd.f32 %v681, %v684
        %v686 = vrot.slane %v685, 2
        %v687 = vadd.f32 %v685, %v686
        %v688 = vrot.slane %v687, 1
        %v689 = vadd.f32 %v687, %v688
        %v690 = vrot.slane %v683, 4
        %v691 = vadd.f32 %v683, %v690
        %v692 = vrot.slane %v691, 2
        %v693 = vadd.f32 %v691, %v692
        %v694 = vrot.slane %v693, 1
        %v695 = vadd.f32 %v693, %v694
        %v696 = vrcp.pop %v689
        %v697 = vmul.f32 %v689, %v696
        %v698 = vsub.f32 1.0, %v697
        %v699 = vmul.f32 %v696, %v698
        %v700 = vadd.f32 %v696, %v699
        %vm701 = vweird.f32 %v689
        %vm702 = vweird.f32 %v696
        %vm703 = vmor %vm701, %vm702
        %v704 = vsel %vm703, %v696, %v700
        %v705 = vand.u32 2147483647, %v689
        %vm706 = vcmp.eq.f32.partialorder %v705, 8.507059e+37
        %v707 = vand.u32 %v689, 2147483648
        %v708 = vor.u32 1.1754944e-38, %v707
        %v709 = vsel %vm706, %v708, %v704
        %v710 = vmul.f32 %v681, %v709
        %v711 = vrcp.pop %v695
        %v712 = vmul.f32 %v695, %v711
        %v713 = vsub.f32 1.0, %v712
        %v714 = vmul.f32 %v711, %v713
        %v715 = vadd.f32 %v711, %v714
        %vm716 = vweird.f32 %v695
        %vm717 = vweird.f32 %v711
        %vm718 = vmor %vm716, %vm717
        %v719 = vsel %vm718, %v711, %v715
        %v720 = vand.u32 2147483647, %v695
        %vm721 = vcmp.eq.f32.partialorder %v720, 8.507059e+37
        %v722 = vand.u32 %v695, 2147483648
        %v723 = vor.u32 1.1754944e-38, %v722
        %v724 = vsel %vm721, %v723, %v719
        %v725 = vmul.f32 %v683, %v724
        %726 = vst [vmem:[%s228] sm:$0xff] %v710
        %727 = vst [vmem:[%s228 + $0x8] sm:$0xff] %v725
        %vm728 = vcmask 64512
        %v730 = vsel %vm728, %v248, 0
        %v733 = vsel %vm728, %v249, 0
        %v736 = vsel %vm728, %v250, 0
        %v739 = vsel %vm728, %v251, 0
        %741 = vmatpush.msra.mxu0 0.0
        %742 = vmatpush.msra.mxu0 0.0
        %743 = vmatpush.msra.mxu0 0.0
        %744 = vmatpush.msra.mxu0 0.0
        %745 = vmatpush.msra.mxu0 0.0
        %746 = vmatpush.msra.mxu0 0.0
        %747 = vmatpush.msra.mxu0 0.0
        %748 = vmatpush.msra.mxu0 0.0
        %749 = vmatpush.msra.mxu0 0.0
        %750 = vmatpush.msra.mxu0 0.0
        %751 = vmatpush.msra.mxu0 0.0
        %752 = vmatpush.msra.mxu0 0.0
        %753 = vmatpush.msra.mxu0 0.0
        %754 = vmatpush.msra.mxu0 0.0
        %755 = vmatpush.msra.mxu0 0.0
        %v756 = vand.u32 %v710, 4294901760
        %757 = vmatpush.msra.mxu0 %v756
        %v758 = vand.u32 %v730, 4294901760
        %v759 = vsub.f32 %v730, %v758
        %v760 = vand.u32 %v759, 4294901760
        %v761 = vsub.f32 %v759, %v760
        %v762 = vand.u32 %v761, 4294901760
        %763 = vmatmul.f32.gmra.mxu0 %v762
        %v764 = vpop.f32.mrf.mxu0
        %v765 = vadd.f32 0.0, %v764
        %v766 = vand.u32 %v733, 4294901760
        %v767 = vsub.f32 %v733, %v766
        %v768 = vand.u32 %v767, 4294901760
        %v769 = vsub.f32 %v767, %v768
        %v770 = vand.u32 %v769, 4294901760
        %771 = vmatmul.f32.gmra.mxu0 %v770
        %v772 = vpop.f32.mrf.mxu0
        %v773 = vadd.f32 0.0, %v772
        %v774 = vand.u32 %v736, 4294901760
        %v775 = vsub.f32 %v736, %v774
        %v776 = vand.u32 %v775, 4294901760
        %v777 = vsub.f32 %v775, %v776
        %v778 = vand.u32 %v777, 4294901760
        %779 = vmatmul.f32.gmra.mxu0 %v778
        %v780 = vpop.f32.mrf.mxu0
        %v781 = vadd.f32 0.0, %v780
        %v782 = vand.u32 %v739, 4294901760
        %v783 = vsub.f32 %v739, %v782
        %v784 = vand.u32 %v783, 4294901760
        %v785 = vsub.f32 %v783, %v784
        %v786 = vand.u32 %v785, 4294901760
        %787 = vmatmul.f32.gmra.mxu0 %v786
        %v788 = vpop.f32.mrf.mxu0
        %v789 = vadd.f32 0.0, %v788
        %790 = vdwg.mxu0
        %791 = vmatpush.msra.mxu0 0.0
        %792 = vmatpush.msra.mxu0 0.0
        %793 = vmatpush.msra.mxu0 0.0
        %794 = vmatpush.msra.mxu0 0.0
        %795 = vmatpush.msra.mxu0 0.0
        %796 = vmatpush.msra.mxu0 0.0
        %797 = vmatpush.msra.mxu0 0.0
        %798 = vmatpush.msra.mxu0 0.0
        %799 = vmatpush.msra.mxu0 0.0
        %800 = vmatpush.msra.mxu0 0.0
        %801 = vmatpush.msra.mxu0 0.0
        %802 = vmatpush.msra.mxu0 0.0
        %803 = vmatpush.msra.mxu0 0.0
        %804 = vmatpush.msra.mxu0 0.0
        %805 = vmatpush.msra.mxu0 0.0
        %v806 = vand.u32 %v710, 4294901760
        %v807 = vsub.f32 %v710, %v806
        %v808 = vand.u32 %v807, 4294901760
        %v809 = vsub.f32 %v807, %v808
        %v810 = vand.u32 %v809, 4294901760
        %811 = vmatpush.msra.mxu0 %v810
        %v812 = vand.u32 %v730, 4294901760
        %813 = vmatmul.f32.gmra.mxu0 %v812
        %v814 = vpop.f32.mrf.mxu0
        %v815 = vadd.f32 %v765, %v814
        %v816 = vand.u32 %v733, 4294901760
        %817 = vmatmul.f32.gmra.mxu0 %v816
        %v818 = vpop.f32.mrf.mxu0
        %v819 = vadd.f32 %v773, %v818
        %v820 = vand.u32 %v736, 4294901760
        %821 = vmatmul.f32.gmra.mxu0 %v820
        %v822 = vpop.f32.mrf.mxu0
        %v823 = vadd.f32 %v781, %v822
        %v824 = vand.u32 %v739, 4294901760
        %825 = vmatmul.f32.gmra.mxu0 %v824
        %v826 = vpop.f32.mrf.mxu0
        %v827 = vadd.f32 %v789, %v826
        %828 = vdwg.mxu0
        %829 = vmatpush.msra.mxu0 0.0
        %830 = vmatpush.msra.mxu0 0.0
        %831 = vmatpush.msra.mxu0 0.0
        %832 = vmatpush.msra.mxu0 0.0
        %833 = vmatpush.msra.mxu0 0.0
        %834 = vmatpush.msra.mxu0 0.0
        %835 = vmatpush.msra.mxu0 0.0
        %836 = vmatpush.msra.mxu0 0.0
        %837 = vmatpush.msra.mxu0 0.0
        %838 = vmatpush.msra.mxu0 0.0
        %839 = vmatpush.msra.mxu0 0.0
        %840 = vmatpush.msra.mxu0 0.0
        %841 = vmatpush.msra.mxu0 0.0
        %842 = vmatpush.msra.mxu0 0.0
        %843 = vmatpush.msra.mxu0 0.0
        %v844 = vand.u32 %v710, 4294901760
        %v845 = vsub.f32 %v710, %v844
        %846 = vmatpush.msra.mxu0 %v845
        %v847 = vand.u32 %v730, 4294901760
        %v848 = vsub.f32 %v730, %v847
        %849 = vmatmul.f32.gmra.mxu0 %v848
        %v850 = vpop.f32.mrf.mxu0
        %v851 = vadd.f32 %v815, %v850
        %v852 = vand.u32 %v733, 4294901760
        %v853 = vsub.f32 %v733, %v852
        %854 = vmatmul.f32.gmra.mxu0 %v853
        %v855 = vpop.f32.mrf.mxu0
        %v856 = vadd.f32 %v819, %v855
        %v857 = vand.u32 %v736, 4294901760
        %v858 = vsub.f32 %v736, %v857
        %859 = vmatmul.f32.gmra.mxu0 %v858
        %v860 = vpop.f32.mrf.mxu0
        %v861 = vadd.f32 %v823, %v860
        %v862 = vand.u32 %v739, 4294901760
        %v863 = vsub.f32 %v739, %v862
        %864 = vmatmul.f32.gmra.mxu0 %v863
        %v865 = vpop.f32.mrf.mxu0
        %v866 = vadd.f32 %v827, %v865
        %867 = vdwg.mxu0
        %868 = vmatpush.msra.mxu0 0.0
        %869 = vmatpush.msra.mxu0 0.0
        %870 = vmatpush.msra.mxu0 0.0
        %871 = vmatpush.msra.mxu0 0.0
        %872 = vmatpush.msra.mxu0 0.0
        %873 = vmatpush.msra.mxu0 0.0
        %874 = vmatpush.msra.mxu0 0.0
        %875 = vmatpush.msra.mxu0 0.0
        %876 = vmatpush.msra.mxu0 0.0
        %877 = vmatpush.msra.mxu0 0.0
        %878 = vmatpush.msra.mxu0 0.0
        %879 = vmatpush.msra.mxu0 0.0
        %880 = vmatpush.msra.mxu0 0.0
        %881 = vmatpush.msra.mxu0 0.0
        %882 = vmatpush.msra.mxu0 0.0
        %v883 = vand.u32 %v710, 4294901760
        %884 = vmatpush.msra.mxu0 %v883
        %v885 = vand.u32 %v730, 4294901760
        %v886 = vsub.f32 %v730, %v885
        %v887 = vand.u32 %v886, 4294901760
        %888 = vmatmul.f32.gmra.mxu0 %v887
        %v889 = vpop.f32.mrf.mxu0
        %v890 = vadd.f32 %v851, %v889
        %v891 = vand.u32 %v733, 4294901760
        %v892 = vsub.f32 %v733, %v891
        %v893 = vand.u32 %v892, 4294901760
        %894 = vmatmul.f32.gmra.mxu0 %v893
        %v895 = vpop.f32.mrf.mxu0
        %v896 = vadd.f32 %v856, %v895
        %v897 = vand.u32 %v736, 4294901760
        %v898 = vsub.f32 %v736, %v897
        %v899 = vand.u32 %v898, 4294901760
        %900 = vmatmul.f32.gmra.mxu0 %v899
        %v901 = vpop.f32.mrf.mxu0
        %v902 = vadd.f32 %v861, %v901
        %v903 = vand.u32 %v739, 4294901760
        %v904 = vsub.f32 %v739, %v903
        %v905 = vand.u32 %v904, 4294901760
        %906 = vmatmul.f32.gmra.mxu0 %v905
        %v907 = vpop.f32.mrf.mxu0
        %v908 = vadd.f32 %v866, %v907
        %909 = vdwg.mxu0
        %910 = vmatpush.msra.mxu0 0.0
        %911 = vmatpush.msra.mxu0 0.0
        %912 = vmatpush.msra.mxu0 0.0
        %913 = vmatpush.msra.mxu0 0.0
        %914 = vmatpush.msra.mxu0 0.0
        %915 = vmatpush.msra.mxu0 0.0
        %916 = vmatpush.msra.mxu0 0.0
        %917 = vmatpush.msra.mxu0 0.0
        %918 = vmatpush.msra.mxu0 0.0
        %919 = vmatpush.msra.mxu0 0.0
        %920 = vmatpush.msra.mxu0 0.0
        %921 = vmatpush.msra.mxu0 0.0
        %922 = vmatpush.msra.mxu0 0.0
        %923 = vmatpush.msra.mxu0 0.0
        %924 = vmatpush.msra.mxu0 0.0
        %v925 = vand.u32 %v710, 4294901760
        %v926 = vsub.f32 %v710, %v925
        %v927 = vand.u32 %v926, 4294901760
        %928 = vmatpush.msra.mxu0 %v927
        %v929 = vand.u32 %v730, 4294901760
        %930 = vmatmul.f32.gmra.mxu0 %v929
        %v931 = vpop.f32.mrf.mxu0
        %v932 = vadd.f32 %v890, %v931
        %v933 = vand.u32 %v733, 4294901760
        %934 = vmatmul.f32.gmra.mxu0 %v933
        %v935 = vpop.f32.mrf.mxu0
        %v936 = vadd.f32 %v896, %v935
        %v937 = vand.u32 %v736, 4294901760
        %938 = vmatmul.f32.gmra.mxu0 %v937
        %v939 = vpop.f32.mrf.mxu0
        %v940 = vadd.f32 %v902, %v939
        %v941 = vand.u32 %v739, 4294901760
        %942 = vmatmul.f32.gmra.mxu0 %v941
        %v943 = vpop.f32.mrf.mxu0
        %v944 = vadd.f32 %v908, %v943
        %945 = vdwg.mxu0
        %946 = vmatpush.msra.mxu0 0.0
        %947 = vmatpush.msra.mxu0 0.0
        %948 = vmatpush.msra.mxu0 0.0
        %949 = vmatpush.msra.mxu0 0.0
        %950 = vmatpush.msra.mxu0 0.0
        %951 = vmatpush.msra.mxu0 0.0
        %952 = vmatpush.msra.mxu0 0.0
        %953 = vmatpush.msra.mxu0 0.0
        %954 = vmatpush.msra.mxu0 0.0
        %955 = vmatpush.msra.mxu0 0.0
        %956 = vmatpush.msra.mxu0 0.0
        %957 = vmatpush.msra.mxu0 0.0
        %958 = vmatpush.msra.mxu0 0.0
        %959 = vmatpush.msra.mxu0 0.0
        %960 = vmatpush.msra.mxu0 0.0
        %v961 = vand.u32 %v710, 4294901760
        %962 = vmatpush.msra.mxu0 %v961
        %v963 = vand.u32 %v730, 4294901760
        %964 = vmatmul.f32.gmra.mxu0 %v963
        %v965 = vpop.f32.mrf.mxu0
        %v966 = vadd.f32 %v932, %v965
        %v967 = vand.u32 %v733, 4294901760
        %968 = vmatmul.f32.gmra.mxu0 %v967
        %v969 = vpop.f32.mrf.mxu0
        %v970 = vadd.f32 %v936, %v969
        %v971 = vand.u32 %v736, 4294901760
        %972 = vmatmul.f32.gmra.mxu0 %v971
        %v973 = vpop.f32.mrf.mxu0
        %v974 = vadd.f32 %v940, %v973
        %v975 = vand.u32 %v739, 4294901760
        %976 = vmatmul.f32.gmra.mxu0 %v975
        %v977 = vpop.f32.mrf.mxu0
        %v978 = vadd.f32 %v944, %v977
        %979 = vdwg.mxu0
        %980 = vmatpush.msra.mxu0 0.0
        %981 = vmatpush.msra.mxu0 0.0
        %982 = vmatpush.msra.mxu0 0.0
        %983 = vmatpush.msra.mxu0 0.0
        %984 = vmatpush.msra.mxu0 0.0
        %985 = vmatpush.msra.mxu0 0.0
        %986 = vmatpush.msra.mxu0 0.0
        %987 = vmatpush.msra.mxu0 0.0
        %988 = vmatpush.msra.mxu0 0.0
        %989 = vmatpush.msra.mxu0 0.0
        %990 = vmatpush.msra.mxu0 0.0
        %991 = vmatpush.msra.mxu0 0.0
        %992 = vmatpush.msra.mxu0 0.0
        %993 = vmatpush.msra.mxu0 0.0
        %994 = vmatpush.msra.mxu0 0.0
        %v995 = vand.u32 %v725, 4294901760
        %996 = vmatpush.msra.mxu0 %v995
        %v997 = vand.u32 %v730, 4294901760
        %v998 = vsub.f32 %v730, %v997
        %v999 = vand.u32 %v998, 4294901760
        %v1000 = vsub.f32 %v998, %v999
        %v1001 = vand.u32 %v1000, 4294901760
        %1002 = vmatmul.f32.gmra.mxu0 %v1001
        %v1003 = vpop.f32.mrf.mxu0
        %v1004 = vadd.f32 0.0, %v1003
        %v1005 = vand.u32 %v733, 4294901760
        %v1006 = vsub.f32 %v733, %v1005
        %v1007 = vand.u32 %v1006, 4294901760
        %v1008 = vsub.f32 %v1006, %v1007
        %v1009 = vand.u32 %v1008, 4294901760
        %1010 = vmatmul.f32.gmra.mxu0 %v1009
        %v1011 = vpop.f32.mrf.mxu0
        %v1012 = vadd.f32 0.0, %v1011
        %v1013 = vand.u32 %v736, 4294901760
        %v1014 = vsub.f32 %v736, %v1013
        %v1015 = vand.u32 %v1014, 4294901760
        %v1016 = vsub.f32 %v1014, %v1015
        %v1017 = vand.u32 %v1016, 4294901760
        %1018 = vmatmul.f32.gmra.mxu0 %v1017
        %v1019 = vpop.f32.mrf.mxu0
        %v1020 = vadd.f32 0.0, %v1019
        %v1021 = vand.u32 %v739, 4294901760
        %v1022 = vsub.f32 %v739, %v1021
        %v1023 = vand.u32 %v1022, 4294901760
        %v1024 = vsub.f32 %v1022, %v1023
        %v1025 = vand.u32 %v1024, 4294901760
        %1026 = vmatmul.f32.gmra.mxu0 %v1025
        %v1027 = vpop.f32.mrf.mxu0
        %v1028 = vadd.f32 0.0, %v1027
        %1029 = vdwg.mxu0
        %1030 = vmatpush.msra.mxu0 0.0
        %1031 = vmatpush.msra.mxu0 0.0
        %1032 = vmatpush.msra.mxu0 0.0
        %1033 = vmatpush.msra.mxu0 0.0
        %1034 = vmatpush.msra.mxu0 0.0
        %1035 = vmatpush.msra.mxu0 0.0
        %1036 = vmatpush.msra.mxu0 0.0
        %1037 = vmatpush.msra.mxu0 0.0
        %1038 = vmatpush.msra.mxu0 0.0
        %1039 = vmatpush.msra.mxu0 0.0
        %1040 = vmatpush.msra.mxu0 0.0
        %1041 = vmatpush.msra.mxu0 0.0
        %1042 = vmatpush.msra.mxu0 0.0
        %1043 = vmatpush.msra.mxu0 0.0
        %1044 = vmatpush.msra.mxu0 0.0
        %v1045 = vand.u32 %v725, 4294901760
        %v1046 = vsub.f32 %v725, %v1045
        %v1047 = vand.u32 %v1046, 4294901760
        %v1048 = vsub.f32 %v1046, %v1047
        %v1049 = vand.u32 %v1048, 4294901760
        %1050 = vmatpush.msra.mxu0 %v1049
        %v1051 = vand.u32 %v730, 4294901760
        %1052 = vmatmul.f32.gmra.mxu0 %v1051
        %v1053 = vpop.f32.mrf.mxu0
        %v1054 = vadd.f32 %v1004, %v1053
        %v1055 = vand.u32 %v733, 4294901760
        %1056 = vmatmul.f32.gmra.mxu0 %v1055
        %v1057 = vpop.f32.mrf.mxu0
        %v1058 = vadd.f32 %v1012, %v1057
        %v1059 = vand.u32 %v736, 4294901760
        %1060 = vmatmul.f32.gmra.mxu0 %v1059
        %v1061 = vpop.f32.mrf.mxu0
        %v1062 = vadd.f32 %v1020, %v1061
        %v1063 = vand.u32 %v739, 4294901760
        %1064 = vmatmul.f32.gmra.mxu0 %v1063
        %v1065 = vpop.f32.mrf.mxu0
        %v1066 = vadd.f32 %v1028, %v1065
        %1067 = vdwg.mxu0
        %1068 = vmatpush.msra.mxu0 0.0
        %1069 = vmatpush.msra.mxu0 0.0
        %1070 = vmatpush.msra.mxu0 0.0
        %1071 = vmatpush.msra.mxu0 0.0
        %1072 = vmatpush.msra.mxu0 0.0
        %1073 = vmatpush.msra.mxu0 0.0
        %1074 = vmatpush.msra.mxu0 0.0
        %1075 = vmatpush.msra.mxu0 0.0
        %1076 = vmatpush.msra.mxu0 0.0
        %1077 = vmatpush.msra.mxu0 0.0
        %1078 = vmatpush.msra.mxu0 0.0
        %1079 = vmatpush.msra.mxu0 0.0
        %1080 = vmatpush.msra.mxu0 0.0
        %1081 = vmatpush.msra.mxu0 0.0
        %1082 = vmatpush.msra.mxu0 0.0
        %v1083 = vand.u32 %v725, 4294901760
        %v1084 = vsub.f32 %v725, %v1083
        %1085 = vmatpush.msra.mxu0 %v1084
        %v1086 = vand.u32 %v730, 4294901760
        %v1087 = vsub.f32 %v730, %v1086
        %1088 = vmatmul.f32.gmra.mxu0 %v1087
        %v1089 = vpop.f32.mrf.mxu0
        %v1090 = vadd.f32 %v1054, %v1089
        %v1091 = vand.u32 %v733, 4294901760
        %v1092 = vsub.f32 %v733, %v1091
        %1093 = vmatmul.f32.gmra.mxu0 %v1092
        %v1094 = vpop.f32.mrf.mxu0
        %v1095 = vadd.f32 %v1058, %v1094
        %v1096 = vand.u32 %v736, 4294901760
        %v1097 = vsub.f32 %v736, %v1096
        %1098 = vmatmul.f32.gmra.mxu0 %v1097
        %v1099 = vpop.f32.mrf.mxu0
        %v1100 = vadd.f32 %v1062, %v1099
        %v1101 = vand.u32 %v739, 4294901760
        %v1102 = vsub.f32 %v739, %v1101
        %1103 = vmatmul.f32.gmra.mxu0 %v1102
        %v1104 = vpop.f32.mrf.mxu0
        %v1105 = vadd.f32 %v1066, %v1104
        %1106 = vdwg.mxu0
        %1107 = vmatpush.msra.mxu0 0.0
        %1108 = vmatpush.msra.mxu0 0.0
        %1109 = vmatpush.msra.mxu0 0.0
        %1110 = vmatpush.msra.mxu0 0.0
        %1111 = vmatpush.msra.mxu0 0.0
        %1112 = vmatpush.msra.mxu0 0.0
        %1113 = vmatpush.msra.mxu0 0.0
        %1114 = vmatpush.msra.mxu0 0.0
        %1115 = vmatpush.msra.mxu0 0.0
        %1116 = vmatpush.msra.mxu0 0.0
        %1117 = vmatpush.msra.mxu0 0.0
        %1118 = vmatpush.msra.mxu0 0.0
        %1119 = vmatpush.msra.mxu0 0.0
        %1120 = vmatpush.msra.mxu0 0.0
        %1121 = vmatpush.msra.mxu0 0.0
        %v1122 = vand.u32 %v725, 4294901760
        %1123 = vmatpush.msra.mxu0 %v1122
        %v1124 = vand.u32 %v730, 4294901760
        %v1125 = vsub.f32 %v730, %v1124
        %v1126 = vand.u32 %v1125, 4294901760
        %1127 = vmatmul.f32.gmra.mxu0 %v1126
        %v1128 = vpop.f32.mrf.mxu0
        %v1129 = vadd.f32 %v1090, %v1128
        %v1130 = vand.u32 %v733, 4294901760
        %v1131 = vsub.f32 %v733, %v1130
        %v1132 = vand.u32 %v1131, 4294901760
        %1133 = vmatmul.f32.gmra.mxu0 %v1132
        %v1134 = vpop.f32.mrf.mxu0
        %v1135 = vadd.f32 %v1095, %v1134
        %v1136 = vand.u32 %v736, 4294901760
        %v1137 = vsub.f32 %v736, %v1136
        %v1138 = vand.u32 %v1137, 4294901760
        %1139 = vmatmul.f32.gmra.mxu0 %v1138
        %v1140 = vpop.f32.mrf.mxu0
        %v1141 = vadd.f32 %v1100, %v1140
        %v1142 = vand.u32 %v739, 4294901760
        %v1143 = vsub.f32 %v739, %v1142
        %v1144 = vand.u32 %v1143, 4294901760
        %1145 = vmatmul.f32.gmra.mxu0 %v1144
        %v1146 = vpop.f32.mrf.mxu0
        %v1147 = vadd.f32 %v1105, %v1146
        %1148 = vdwg.mxu0
        %1149 = vmatpush.msra.mxu0 0.0
        %1150 = vmatpush.msra.mxu0 0.0
        %1151 = vmatpush.msra.mxu0 0.0
        %1152 = vmatpush.msra.mxu0 0.0
        %1153 = vmatpush.msra.mxu0 0.0
        %1154 = vmatpush.msra.mxu0 0.0
        %1155 = vmatpush.msra.mxu0 0.0
        %1156 = vmatpush.msra.mxu0 0.0
        %1157 = vmatpush.msra.mxu0 0.0
        %1158 = vmatpush.msra.mxu0 0.0
        %1159 = vmatpush.msra.mxu0 0.0
        %1160 = vmatpush.msra.mxu0 0.0
        %1161 = vmatpush.msra.mxu0 0.0
        %1162 = vmatpush.msra.mxu0 0.0
        %1163 = vmatpush.msra.mxu0 0.0
        %v1164 = vand.u32 %v725, 4294901760
        %v1165 = vsub.f32 %v725, %v1164
        %v1166 = vand.u32 %v1165, 4294901760
        %1167 = vmatpush.msra.mxu0 %v1166
        %v1168 = vand.u32 %v730, 4294901760
        %1169 = vmatmul.f32.gmra.mxu0 %v1168
        %v1170 = vpop.f32.mrf.mxu0
        %v1171 = vadd.f32 %v1129, %v1170
        %v1172 = vand.u32 %v733, 4294901760
        %1173 = vmatmul.f32.gmra.mxu0 %v1172
        %v1174 = vpop.f32.mrf.mxu0
        %v1175 = vadd.f32 %v1135, %v1174
        %v1176 = vand.u32 %v736, 4294901760
        %1177 = vmatmul.f32.gmra.mxu0 %v1176
        %v1178 = vpop.f32.mrf.mxu0
        %v1179 = vadd.f32 %v1141, %v1178
        %v1180 = vand.u32 %v739, 4294901760
        %1181 = vmatmul.f32.gmra.mxu0 %v1180
        %v1182 = vpop.f32.mrf.mxu0
        %v1183 = vadd.f32 %v1147, %v1182
        %1184 = vdwg.mxu0
        %1185 = vmatpush.msra.mxu0 0.0
        %1186 = vmatpush.msra.mxu0 0.0
        %1187 = vmatpush.msra.mxu0 0.0
        %1188 = vmatpush.msra.mxu0 0.0
        %1189 = vmatpush.msra.mxu0 0.0
        %1190 = vmatpush.msra.mxu0 0.0
        %1191 = vmatpush.msra.mxu0 0.0
        %1192 = vmatpush.msra.mxu0 0.0
        %1193 = vmatpush.msra.mxu0 0.0
        %1194 = vmatpush.msra.mxu0 0.0
        %1195 = vmatpush.msra.mxu0 0.0
        %1196 = vmatpush.msra.mxu0 0.0
        %1197 = vmatpush.msra.mxu0 0.0
        %1198 = vmatpush.msra.mxu0 0.0
        %1199 = vmatpush.msra.mxu0 0.0
        %v1200 = vand.u32 %v725, 4294901760
        %1201 = vmatpush.msra.mxu0 %v1200
        %v1202 = vand.u32 %v730, 4294901760
        %1203 = vmatmul.f32.gmra.mxu0 %v1202
        %v1204 = vpop.f32.mrf.mxu0
        %v1205 = vadd.f32 %v1171, %v1204
        %v1206 = vand.u32 %v733, 4294901760
        %1207 = vmatmul.f32.gmra.mxu0 %v1206
        %v1208 = vpop.f32.mrf.mxu0
        %v1209 = vadd.f32 %v1175, %v1208
        %v1210 = vand.u32 %v736, 4294901760
        %1211 = vmatmul.f32.gmra.mxu0 %v1210
        %v1212 = vpop.f32.mrf.mxu0
        %v1213 = vadd.f32 %v1179, %v1212
        %v1214 = vand.u32 %v739, 4294901760
        %1215 = vmatmul.f32.gmra.mxu0 %v1214
        %v1216 = vpop.f32.mrf.mxu0
        %v1217 = vadd.f32 %v1183, %v1216
        %1218 = vdwg.mxu0
        %1219 = vst [vmem:[%s221] sm:$0xff] %v966
        %1220 = vst [vmem:[%s221 + $0x8] sm:$0xff] %v1205
        %1221 = vst [vmem:[%s221 + $0x10] sm:$0xff] %v970
        %1222 = vst [vmem:[%s221 + $0x18] sm:$0xff] %v1209
        %1223 = vst [vmem:[%s221 + $0x20] sm:$0xff] %v974
        %1224 = vst [vmem:[%s221 + $0x28] sm:$0xff] %v1213
        %1225 = vst [vmem:[%s221 + $0x30] sm:$0xff] %v978
        %1226 = vst [vmem:[%s221 + $0x38] sm:$0xff] %v1217
        %s1227 = sand.u32 %s114, 1
        %s1228 = scalar_lea.sflag [#allocation3], %s1227
        %s1229 = sand.u32 %s114, 1
        %s1230 = smul.addr %s1229, 64
        %s1231 = scalar_lea.vmem [#allocation2], %s1230
        %s1232 = sand.u32 %s142, 1
        %s1233 = scalar_lea.sflag [#allocation5], %s1232
        %s1234 = sand.u32 %s142, 1
        %s1235 = smul.addr %s1234, 16
        %s1236 = scalar_lea.vmem [#allocation4], %s1235
        // Predicated region
        $region33: #{tpu_custom_call.1} parent=31 // pred_check
          %p1237 = pneg %p124
        $region34: #{tpu_custom_call.1} parent=31 // pred_check_branch
          %1239 = sbr.rel (%p1237) target = $region36
        $region35: #{tpu_custom_call.1} parent=31 // pred_region
          %s1240 = smul.u32 2, %s27
          %1242 = vsyncadd %s1228, 0
          %s1243 = smul.addr %s26, 8
          %s1244 = sadd.s32 %s1240, %s1243
          %s1245 = smul.addr %s1244, 8
          %s1246 = scalar_lea.hbm %s3, %s1245
          %s1247 = sshll.u32 %s1231, 4
          %s1248 = int_to_ptr.vmem [resolvable:$true] %s1247
          %s1249 = sshll.u32 %s1246, 4
          %s1250 = int_to_ptr.hbm [resolvable:$true] %s1249
          %1255 = dma.vmem_to_hbm [thread:$0]  %s1248, 1024, %s1250, %s1228, 256, 256, 16
        $region36: #{tpu_custom_call.1} parent=31 // pred_fallthru
          _
        // Predicated region
        $region37: #{tpu_custom_call.1} parent=31 // pred_check
          %p1256 = pneg %p152
        $region38: #{tpu_custom_call.1} parent=31 // pred_check_branch
          %1258 = sbr.rel (%p1256) target = $region40
        $region39: #{tpu_custom_call.1} parent=31 // pred_region
          %s1259 = smul.u32 2, %s27
          %1261 = vsyncadd %s1233, 0
          %s1262 = smul.addr %s26, 2
          %s1263 = sadd.s32 %s1259, %s1262
          %s1264 = smul.addr %s1263, 8
          %s1265 = scalar_lea.hbm %s4, %s1264
          %s1267 = sshll.u32 %s1236, 4
          %s1268 = int_to_ptr.vmem [resolvable:$true] %s1267
          %s1269 = sshll.u32 %s1265, 4
          %s1270 = int_to_ptr.hbm [resolvable:$true] %s1269
          %1272 = dma.vmem_to_hbm [thread:$0]  %s1268, 256, %s1270, %s1233
        $region40: #{tpu_custom_call.1} parent=31 // pred_fallthru
          _
      $region32: #{tpu_custom_call.1} parent=5 // pred_fallthru
        _
      %p1273 = scmp.le.s32.totalorder 2, %s17
      // Predicated region
      $region41: #{tpu_custom_call.1} parent=5 // pred_check
        %p1274 = pneg %p1273
      $region42: #{tpu_custom_call.1} parent=5 // pred_check_branch
        %1276 = sbr.rel (%p1274) target = $region44
      $region43: #{tpu_custom_call.1} parent=5 // pred_region
        %s1277 = ssub.s32 %s17, 2
        // Predicated region
        $region45: #{tpu_custom_call.1} parent=43 // pred_check
          %p1278 = pneg %p130
        $region46: #{tpu_custom_call.1} parent=43 // pred_check_branch
          %1280 = sbr.rel (%p1278) target = $region48
        $region47: #{tpu_custom_call.1} parent=43 // pred_region
          %s1281 = sand.u32 %s115, 1
          %s1282 = scalar_lea.sflag [#allocation3], %s1281
          %s1283 = sand.u32 %s115, 1
          %s1284 = smul.addr %s1283, 64
          %s1285 = scalar_lea.vmem [#allocation2], %s1284
          %1287 = dma.done %s1282, 1024
        $region48: #{tpu_custom_call.1} parent=43 // pred_fallthru
          _
        // Predicated region
        $region49: #{tpu_custom_call.1} parent=43 // pred_check
          %p1288 = pneg %p158
        $region50: #{tpu_custom_call.1} parent=43 // pred_check_branch
          %1290 = sbr.rel (%p1288) target = $region52
        $region51: #{tpu_custom_call.1} parent=43 // pred_region
          %s1291 = sand.u32 %s143, 1
          %s1292 = scalar_lea.sflag [#allocation5], %s1291
          %s1293 = sand.u32 %s143, 1
          %s1294 = smul.addr %s1293, 16
          %s1295 = scalar_lea.vmem [#allocation4], %s1294
          %1297 = dma.done %s1292, 256
        $region52: #{tpu_custom_call.1} parent=43 // pred_fallthru
          _
      $region44: #{tpu_custom_call.1} parent=5 // pred_fallthru
        _
    $region6: #{tpu_custom_call.1} parent=1 // loop_footer
      %s21 = sadd.s32 1, %s17
    $region7: #{tpu_custom_call.1} parent=1 // loop_footer_branch
      %16 = sbr.rel target = $region3
    $region8: #{tpu_custom_call.1} parent=1 // loop_exit
      _
    %1298 = vsyncpa [#allocation3], 1
    %s1299 = scalar_lea.sflag [#allocation3], 1
    %1300 = vsyncpa %s1299, 1
    %1301 = vsyncpa [#allocation5], 1
    %s1302 = scalar_lea.sflag [#allocation5], 1
    %1303 = vsyncpa %s1302, 1

</llo_original>
